<compile_context>
chip_gen: v7x
topology: tpu7x:2x2x1
jax: 0.10.0
libtpu: 0.0.40
codegen_flags: <defaults>
</compile_context>

<pallas_src>
import functools

import jax
import jax.numpy as jnp
from jax.experimental import pallas as pl
from jax.experimental.pallas import tpu as pltpu


def _fold_rows(a, group=8):
    """Sum an (R, L) block down to (group, L) by adding row-groups.

    Pure sublane-group adds of full tiles — avoids a cross-lane XLU reduction and a
    lane-masked (1,1) store on every grid step.  Requires R % group == 0.
    """
    acc = a[0:group, :]
    for k in range(1, a.shape[0] // group):
        acc = acc + a[k * group:(k + 1) * group, :]
    return acc


def _linear_loss_kernel(x_ref, mh_ref, mwt_ref, label_ref, loss_ref, cnt_ref,
                        *, n_classes: int, h: int):
    C = n_classes
    x = x_ref[0]                          # (C*h, w)  bf16  (classes folded into M)
    mwt = mwt_ref[...]                    # (w, Wp)   bf16  (zero-padded cols >= W)
    mh = mh_ref[...]                      # (tH, h)   bf16  (zero-padded rows >= H)

    # Column (W) interpolation for ALL classes in one lane-dense MXU matmul.
    t = jnp.dot(x, mwt, preferred_element_type=jnp.float32)      # (C*h, Wp) f32
    t = t.astype(jnp.bfloat16)

    labels = label_ref[0]                 # (tH, Wp) int32
    valid = (labels >= 0) & (labels < C)
    safe = jnp.where(valid, labels, 0)

    tH, Wp = labels.shape
    m = jnp.full((tH, Wp), -1e30, jnp.float32)       # running max
    se = jnp.zeros((tH, Wp), jnp.float32)            # running sum of exp
    picked = jnp.zeros((tH, Wp), jnp.float32)        # logit of the target class

    # Row (H) interpolation + online logsumexp, streamed over classes.
    # Static slices of `t` land on sublane boundaries (h rows per class).
    for c in range(C):
        tc = t[c * h:(c + 1) * h, :]                                   # (h, Wp)
        up_c = jnp.dot(mh, tc, preferred_element_type=jnp.float32)     # (tH, Wp)
        m_new = jnp.maximum(m, up_c)
        se = se * jnp.exp(m - m_new) + jnp.exp(up_c - m_new)
        picked = jnp.where(safe == c, up_c, picked)
        m = m_new

    per_pixel = (jnp.log(se) + m) - picked           # logsumexp(z) - z_target
    loss = jnp.where(valid, per_pixel, 0.0)
    cnt = valid.astype(jnp.float32)

    # (8, Wp) vector partials per grid step; scalar reduction happens in the wrapper.
    loss_ref[0, 0] = _fold_rows(loss)
    cnt_ref[0, 0] = _fold_rows(cnt)


def _interp_matrix(out_size: int, in_size: int) -> jnp.ndarray:
    # PyTorch F.interpolate(mode='bilinear', align_corners=False) weights (1-D).
    scale = in_size / out_size
    dst = jnp.arange(out_size, dtype=jnp.float32)
    src = jnp.maximum((dst + 0.5) * scale - 0.5, 0.0)
    i0 = jnp.minimum(jnp.floor(src).astype(jnp.int32), in_size - 1)
    i1 = jnp.minimum(i0 + 1, in_size - 1)
    w1 = src - i0.astype(jnp.float32)
    w0 = 1.0 - w1
    rows = jnp.arange(out_size)
    M = jnp.zeros((out_size, in_size), jnp.float32)
    M = M.at[rows, i0].add(w0)
    M = M.at[rows, i1].add(w1)
    return M


@functools.partial(jax.jit, static_argnames=("n_classes",))
def linear_loss(linear_logits, label, n_classes: int):
    B, C, h, w = linear_logits.shape
    assert C == n_classes
    H, W = label.shape[-2], label.shape[-1]
    label = label.reshape(B, H, W).astype(jnp.int32)

    # Pad to lane/sublane-dense sizes.
    Hp = -(-H // 8) * 8
    Wp = -(-W // 128) * 128

    # H-tile size: whole (padded) H for small problems (one grid step per batch,
    # minimal step overhead); for large H pick a divisor <= 256 so the working set
    # stays well inside v7x's 64 MiB VMEM while keeping the pipeline fed.
    block_h = Hp
    if Hp > 256:
        for cand in (256, 128, 64, 32, 16):
            if Hp % cand == 0:
                block_h = cand
                break
    nH = Hp // block_h

    # bf16 operands for the MXU (f32 accumulation happens inside the kernel).
    x = linear_logits.reshape(B, C * h, w).astype(jnp.bfloat16)   # classes folded into M
    mh = jnp.zeros((Hp, h), jnp.float32).at[:H].set(_interp_matrix(H, h))
    mh = mh.astype(jnp.bfloat16)                                  # (Hp, h) row interp
    mwt = jnp.zeros((w, Wp), jnp.float32).at[:, :W].set(_interp_matrix(W, w).T)
    mwt = mwt.astype(jnp.bfloat16)                                # (w, Wp) col interp
    # Pad labels with -1 (invalid -> masked) so the pixel block is lane-dense.
    label_p = jnp.pad(label, ((0, 0), (0, Hp - H), (0, Wp - W)), constant_values=-1)

    flops = 2 * B * C * h * Wp * (w + Hp)
    transcendentals = B * Hp * Wp * (C + 1)
    bytes_accessed = (x.size * 2 + label_p.size * 4 + mh.size * 2 + mwt.size * 2
                      + 2 * B * nH * 8 * Wp * 4)

    kernel = functools.partial(_linear_loss_kernel, n_classes=C, h=h)
    loss_p, cnt_p = pl.pallas_call(
        kernel,
        out_shape=(jax.ShapeDtypeStruct((B, nH, 8, Wp), jnp.float32),
                   jax.ShapeDtypeStruct((B, nH, 8, Wp), jnp.float32)),
        grid_spec=pltpu.PrefetchScalarGridSpec(
            num_scalar_prefetch=0,
            grid=(B, nH),
            in_specs=[
                pl.BlockSpec((1, C * h, w), lambda b, i: (b, 0, 0)),
                pl.BlockSpec((block_h, h), lambda b, i: (i, 0)),
                pl.BlockSpec((w, Wp), lambda b, i: (0, 0)),
                pl.BlockSpec((1, block_h, Wp), lambda b, i: (b, i, 0)),
            ],
            out_specs=[
                pl.BlockSpec((1, 1, 8, Wp), lambda b, i: (b, i, 0, 0)),
                pl.BlockSpec((1, 1, 8, Wp), lambda b, i: (b, i, 0, 0)),
            ],
        ),
        compiler_params=pltpu.CompilerParams(
            dimension_semantics=("parallel", "parallel")),
        cost_estimate=pl.CostEstimate(flops=flops,
                                      transcendentals=transcendentals,
                                      bytes_accessed=bytes_accessed),
    )(x, mh, mwt, label_p)

    # Final masked mean from per-step partials (matches reference: NaN if no valid label).
    return jnp.sum(loss_p) / jnp.sum(cnt_p)


def linear_loss_ref(linear_logits, label, n_classes: int):
    # Pure-JAX f32 reference (same align_corners=False interpolation formulation).
    B, C, h, w = linear_logits.shape
    H, W = label.shape[-2], label.shape[-1]
    mh = _interp_matrix(H, h)
    mw = _interp_matrix(W, w)
    up = jnp.einsum('Hh,bchw,Ww->bcHW', mh, linear_logits.astype(jnp.float32), mw)
    logits = up.transpose(0, 2, 3, 1).reshape(-1, n_classes)
    flat = label.reshape(-1)
    valid = (flat >= 0) & (flat < n_classes)
    safe = jnp.where(valid, flat, 0)
    lse = jax.scipy.special.logsumexp(logits, axis=-1)
    picked = jnp.take_along_axis(logits, safe[:, None], axis=-1)[:, 0]
    per = lse - picked
    return jnp.sum(jnp.where(valid, per, 0.0)) / jnp.sum(valid)


if __name__ == "__main__":
    B, n_classes = 2, 8
    h, w = 8, 8          # logits spatial resolution
    H, W = 16, 16        # label spatial resolution (upsample target)

    key = jax.random.PRNGKey(0)
    k1, k2 = jax.random.split(key)
    linear_logits = jax.random.normal(k1, (B, n_classes, h, w), dtype=jnp.float32)
    # labels include some invalid entries (-1 and n_classes) that get masked out
    label = jax.random.randint(k2, (B, H, W), -1, n_classes + 1, dtype=jnp.int32)

    out = linear_loss(linear_logits, label, n_classes)
    out = jax.block_until_ready(out)

    ref = linear_loss_ref(linear_logits, label, n_classes)
    # Kernel upsamples with bf16 MXU operands (f32 accumulation), so compare against
    # the f32 reference with a bf16-appropriate tolerance.
    assert jnp.allclose(out, ref, rtol=2e-2, atol=2e-2), (out, ref)

    print("KERNEL_OK")
</pallas_src>

<mosaic_0001>
module attributes {stable_mosaic.version = 11 : i64} {
  func.func private @main(%arg0: i32) attributes {dimension_semantics = [#tpu.dimension_semantics<core_parallel>], iteration_bounds = array<i64: 2>, tpu.core_type = #tpu.core_type<sc_scalar_subcore>, window_params = []} {
    return
  }
}

module attributes {stable_mosaic.version = 11 : i64} {
  func.func private @main(%arg0: i32) attributes {dimension_semantics = [#tpu.dimension_semantics<core_parallel>], iteration_bounds = array<i64: 2>, tpu.core_type = #tpu.core_type<sc_scalar_subcore>, window_params = []} {
    return
  }
}

module attributes {stable_mosaic.version = 11 : i64} {
  func.func @_linear_loss_kernel(%arg0: i32, %arg1: i32, %arg2: memref<1x64x8xbf16, #tpu.memory_space<vmem>>, %arg3: memref<16x8xbf16, #tpu.memory_space<vmem>>, %arg4: memref<8x128xbf16, #tpu.memory_space<vmem>>, %arg5: memref<1x16x128xi32, #tpu.memory_space<vmem>>, %arg6: memref<1x1x8x128xf32, #tpu.memory_space<vmem>>, %arg7: memref<1x1x8x128xf32, #tpu.memory_space<vmem>>) attributes {dimension_semantics = [#tpu.dimension_semantics<parallel>, #tpu.dimension_semantics<parallel>], iteration_bounds = array<i64: 2, 1>, scalar_prefetch = 0 : i64, scratch_operands = 0 : i64, tpu.core_type = #tpu.core_type<tc>, window_params = [{transform_indices = @transform_0, window_bounds = array<i64: 1, 64, 8>}, {transform_indices = @transform_1, window_bounds = array<i64: 16, 8>}, {pipeline_mode = #tpu.pipeline_mode<synchronous>, transform_indices = @transform_2, window_bounds = array<i64: 8, 128>}, {transform_indices = @transform_3, window_bounds = array<i64: 1, 16, 128>}, {transform_indices = @transform_4, window_bounds = array<i64: 1, 1, 8, 128>}, {transform_indices = @transform_5, window_bounds = array<i64: 1, 1, 8, 128>}]} {
    %c0 = arith.constant 0 : index
    %c0_0 = arith.constant 0 : index
    %c0_1 = arith.constant 0 : index
    %0 = vector.load %arg2[%c0, %c0_0, %c0_1] : memref<1x64x8xbf16, #tpu.memory_space<vmem>>, vector<1x64x8xbf16>
    %1 = vector.shape_cast %0 : vector<1x64x8xbf16> to vector<64x8xbf16>
    %c0_2 = arith.constant 0 : index
    %c0_3 = arith.constant 0 : index
    %2 = vector.load %arg4[%c0_2, %c0_3] : memref<8x128xbf16, #tpu.memory_space<vmem>>, vector<8x128xbf16>
    %c0_4 = arith.constant 0 : index
    %c0_5 = arith.constant 0 : index
    %3 = vector.load %arg3[%c0_4, %c0_5] : memref<16x8xbf16, #tpu.memory_space<vmem>>, vector<16x8xbf16>
    %cst = arith.constant dense<0.000000e+00> : vector<64x128xf32>
    %4 = tpu.matmul %1, %2, %cst {dimension_numbers = #tpu.dot_dimension_numbers<[1], [0], [0], [1], [0, 0, 1, 1], [], []>} : vector<64x8xbf16>, vector<8x128xbf16>, vector<64x128xf32> -> vector<64x128xf32>
    %5 = arith.truncf %4 : vector<64x128xf32> to vector<64x128xbf16>
    %c0_6 = arith.constant 0 : index
    %c0_7 = arith.constant 0 : index
    %c0_8 = arith.constant 0 : index
    %6 = vector.load %arg5[%c0_6, %c0_7, %c0_8] : memref<1x16x128xi32, #tpu.memory_space<vmem>>, vector<1x16x128xi32>
    %7 = vector.shape_cast %6 : vector<1x16x128xi32> to vector<16x128xi32>
    %c0_i32 = arith.constant 0 : i32
    %8 = vector.broadcast %c0_i32 : i32 to vector<16x128xi32>
    %9 = arith.cmpi sge, %7, %8 : vector<16x128xi32>
    %c8_i32 = arith.constant 8 : i32
    %10 = vector.broadcast %c8_i32 : i32 to vector<16x128xi32>
    %11 = arith.cmpi slt, %7, %10 : vector<16x128xi32>
    %12 = arith.andi %9, %11 : vector<16x128xi1>
    %c0_i32_9 = arith.constant 0 : i32
    %13 = vector.broadcast %c0_i32_9 : i32 to vector<16x128xi32>
    %14 = arith.select %12, %7, %13 : vector<16x128xi1>, vector<16x128xi32>
    %cst_10 = arith.constant -1.000000e+30 : f32
    %15 = vector.broadcast %cst_10 : f32 to vector<16x128xf32>
    %cst_11 = arith.constant 0.000000e+00 : f32
    %16 = vector.broadcast %cst_11 : f32 to vector<16x128xf32>
    %cst_12 = arith.constant 0.000000e+00 : f32
    %17 = vector.broadcast %cst_12 : f32 to vector<16x128xf32>
    %18 = vector.extract_strided_slice %5 {offsets = [0, 0], sizes = [8, 128], strides = [1, 1]} : vector<64x128xbf16> to vector<8x128xbf16>
    %cst_13 = arith.constant dense<0.000000e+00> : vector<16x128xf32>
    %19 = tpu.matmul %3, %18, %cst_13 {dimension_numbers = #tpu.dot_dimension_numbers<[1], [0], [0], [1], [0, 0, 1, 1], [], []>} : vector<16x8xbf16>, vector<8x128xbf16>, vector<16x128xf32> -> vector<16x128xf32>
    %20 = arith.maximumf %15, %19 : vector<16x128xf32>
    %21 = arith.subf %15, %20 : vector<16x128xf32>
    %22 = math.exp %21 : vector<16x128xf32>
    %23 = arith.mulf %16, %22 : vector<16x128xf32>
    %24 = arith.subf %19, %20 : vector<16x128xf32>
    %25 = math.exp %24 : vector<16x128xf32>
    %26 = arith.addf %23, %25 : vector<16x128xf32>
    %c0_i32_14 = arith.constant 0 : i32
    %27 = vector.broadcast %c0_i32_14 : i32 to vector<16x128xi32>
    %28 = arith.cmpi eq, %14, %27 : vector<16x128xi32>
    %29 = arith.select %28, %19, %17 : vector<16x128xi1>, vector<16x128xf32>
    %30 = vector.extract_strided_slice %5 {offsets = [8, 0], sizes = [8, 128], strides = [1, 1]} : vector<64x128xbf16> to vector<8x128xbf16>
    %cst_15 = arith.constant dense<0.000000e+00> : vector<16x128xf32>
    %31 = tpu.matmul %3, %30, %cst_15 {dimension_numbers = #tpu.dot_dimension_numbers<[1], [0], [0], [1], [0, 0, 1, 1], [], []>} : vector<16x8xbf16>, vector<8x128xbf16>, vector<16x128xf32> -> vector<16x128xf32>
    %32 = arith.maximumf %20, %31 : vector<16x128xf32>
    %33 = arith.subf %20, %32 : vector<16x128xf32>
    %34 = math.exp %33 : vector<16x128xf32>
    %35 = arith.mulf %26, %34 : vector<16x128xf32>
    %36 = arith.subf %31, %32 : vector<16x128xf32>
    %37 = math.exp %36 : vector<16x128xf32>
    %38 = arith.addf %35, %37 : vector<16x128xf32>
    %c1_i32 = arith.constant 1 : i32
    %39 = vector.broadcast %c1_i32 : i32 to vector<16x128xi32>
    %40 = arith.cmpi eq, %14, %39 : vector<16x128xi32>
    %41 = arith.select %40, %31, %29 : vector<16x128xi1>, vector<16x128xf32>
    %42 = vector.extract_strided_slice %5 {offsets = [16, 0], sizes = [8, 128], strides = [1, 1]} : vector<64x128xbf16> to vector<8x128xbf16>
    %cst_16 = arith.constant dense<0.000000e+00> : vector<16x128xf32>
    %43 = tpu.matmul %3, %42, %cst_16 {dimension_numbers = #tpu.dot_dimension_numbers<[1], [0], [0], [1], [0, 0, 1, 1], [], []>} : vector<16x8xbf16>, vector<8x128xbf16>, vector<16x128xf32> -> vector<16x128xf32>
    %44 = arith.maximumf %32, %43 : vector<16x128xf32>
    %45 = arith.subf %32, %44 : vector<16x128xf32>
    %46 = math.exp %45 : vector<16x128xf32>
    %47 = arith.mulf %38, %46 : vector<16x128xf32>
    %48 = arith.subf %43, %44 : vector<16x128xf32>
    %49 = math.exp %48 : vector<16x128xf32>
    %50 = arith.addf %47, %49 : vector<16x128xf32>
    %c2_i32 = arith.constant 2 : i32
    %51 = vector.broadcast %c2_i32 : i32 to vector<16x128xi32>
    %52 = arith.cmpi eq, %14, %51 : vector<16x128xi32>
    %53 = arith.select %52, %43, %41 : vector<16x128xi1>, vector<16x128xf32>
    %54 = vector.extract_strided_slice %5 {offsets = [24, 0], sizes = [8, 128], strides = [1, 1]} : vector<64x128xbf16> to vector<8x128xbf16>
    %cst_17 = arith.constant dense<0.000000e+00> : vector<16x128xf32>
    %55 = tpu.matmul %3, %54, %cst_17 {dimension_numbers = #tpu.dot_dimension_numbers<[1], [0], [0], [1], [0, 0, 1, 1], [], []>} : vector<16x8xbf16>, vector<8x128xbf16>, vector<16x128xf32> -> vector<16x128xf32>
    %56 = arith.maximumf %44, %55 : vector<16x128xf32>
    %57 = arith.subf %44, %56 : vector<16x128xf32>
    %58 = math.exp %57 : vector<16x128xf32>
    %59 = arith.mulf %50, %58 : vector<16x128xf32>
    %60 = arith.subf %55, %56 : vector<16x128xf32>
    %61 = math.exp %60 : vector<16x128xf32>
    %62 = arith.addf %59, %61 : vector<16x128xf32>
    %c3_i32 = arith.constant 3 : i32
    %63 = vector.broadcast %c3_i32 : i32 to vector<16x128xi32>
    %64 = arith.cmpi eq, %14, %63 : vector<16x128xi32>
    %65 = arith.select %64, %55, %53 : vector<16x128xi1>, vector<16x128xf32>
    %66 = vector.extract_strided_slice %5 {offsets = [32, 0], sizes = [8, 128], strides = [1, 1]} : vector<64x128xbf16> to vector<8x128xbf16>
    %cst_18 = arith.constant dense<0.000000e+00> : vector<16x128xf32>
    %67 = tpu.matmul %3, %66, %cst_18 {dimension_numbers = #tpu.dot_dimension_numbers<[1], [0], [0], [1], [0, 0, 1, 1], [], []>} : vector<16x8xbf16>, vector<8x128xbf16>, vector<16x128xf32> -> vector<16x128xf32>
    %68 = arith.maximumf %56, %67 : vector<16x128xf32>
    %69 = arith.subf %56, %68 : vector<16x128xf32>
    %70 = math.exp %69 : vector<16x128xf32>
    %71 = arith.mulf %62, %70 : vector<16x128xf32>
    %72 = arith.subf %67, %68 : vector<16x128xf32>
    %73 = math.exp %72 : vector<16x128xf32>
    %74 = arith.addf %71, %73 : vector<16x128xf32>
    %c4_i32 = arith.constant 4 : i32
    %75 = vector.broadcast %c4_i32 : i32 to vector<16x128xi32>
    %76 = arith.cmpi eq, %14, %75 : vector<16x128xi32>
    %77 = arith.select %76, %67, %65 : vector<16x128xi1>, vector<16x128xf32>
    %78 = vector.extract_strided_slice %5 {offsets = [40, 0], sizes = [8, 128], strides = [1, 1]} : vector<64x128xbf16> to vector<8x128xbf16>
    %cst_19 = arith.constant dense<0.000000e+00> : vector<16x128xf32>
    %79 = tpu.matmul %3, %78, %cst_19 {dimension_numbers = #tpu.dot_dimension_numbers<[1], [0], [0], [1], [0, 0, 1, 1], [], []>} : vector<16x8xbf16>, vector<8x128xbf16>, vector<16x128xf32> -> vector<16x128xf32>
    %80 = arith.maximumf %68, %79 : vector<16x128xf32>
    %81 = arith.subf %68, %80 : vector<16x128xf32>
    %82 = math.exp %81 : vector<16x128xf32>
    %83 = arith.mulf %74, %82 : vector<16x128xf32>
    %84 = arith.subf %79, %80 : vector<16x128xf32>
    %85 = math.exp %84 : vector<16x128xf32>
    %86 = arith.addf %83, %85 : vector<16x128xf32>
    %c5_i32 = arith.constant 5 : i32
    %87 = vector.broadcast %c5_i32 : i32 to vector<16x128xi32>
    %88 = arith.cmpi eq, %14, %87 : vector<16x128xi32>
    %89 = arith.select %88, %79, %77 : vector<16x128xi1>, vector<16x128xf32>
    %90 = vector.extract_strided_slice %5 {offsets = [48, 0], sizes = [8, 128], strides = [1, 1]} : vector<64x128xbf16> to vector<8x128xbf16>
    %cst_20 = arith.constant dense<0.000000e+00> : vector<16x128xf32>
    %91 = tpu.matmul %3, %90, %cst_20 {dimension_numbers = #tpu.dot_dimension_numbers<[1], [0], [0], [1], [0, 0, 1, 1], [], []>} : vector<16x8xbf16>, vector<8x128xbf16>, vector<16x128xf32> -> vector<16x128xf32>
    %92 = arith.maximumf %80, %91 : vector<16x128xf32>
    %93 = arith.subf %80, %92 : vector<16x128xf32>
    %94 = math.exp %93 : vector<16x128xf32>
    %95 = arith.mulf %86, %94 : vector<16x128xf32>
    %96 = arith.subf %91, %92 : vector<16x128xf32>
    %97 = math.exp %96 : vector<16x128xf32>
    %98 = arith.addf %95, %97 : vector<16x128xf32>
    %c6_i32 = arith.constant 6 : i32
    %99 = vector.broadcast %c6_i32 : i32 to vector<16x128xi32>
    %100 = arith.cmpi eq, %14, %99 : vector<16x128xi32>
    %101 = arith.select %100, %91, %89 : vector<16x128xi1>, vector<16x128xf32>
    %102 = vector.extract_strided_slice %5 {offsets = [56, 0], sizes = [8, 128], strides = [1, 1]} : vector<64x128xbf16> to vector<8x128xbf16>
    %cst_21 = arith.constant dense<0.000000e+00> : vector<16x128xf32>
    %103 = tpu.matmul %3, %102, %cst_21 {dimension_numbers = #tpu.dot_dimension_numbers<[1], [0], [0], [1], [0, 0, 1, 1], [], []>} : vector<16x8xbf16>, vector<8x128xbf16>, vector<16x128xf32> -> vector<16x128xf32>
    %104 = arith.maximumf %92, %103 : vector<16x128xf32>
    %105 = arith.subf %92, %104 : vector<16x128xf32>
    %106 = math.exp %105 : vector<16x128xf32>
    %107 = arith.mulf %98, %106 : vector<16x128xf32>
    %108 = arith.subf %103, %104 : vector<16x128xf32>
    %109 = math.exp %108 : vector<16x128xf32>
    %110 = arith.addf %107, %109 : vector<16x128xf32>
    %c7_i32 = arith.constant 7 : i32
    %111 = vector.broadcast %c7_i32 : i32 to vector<16x128xi32>
    %112 = arith.cmpi eq, %14, %111 : vector<16x128xi32>
    %113 = arith.select %112, %103, %101 : vector<16x128xi1>, vector<16x128xf32>
    %114 = math.log %110 : vector<16x128xf32>
    %115 = arith.addf %114, %104 : vector<16x128xf32>
    %116 = arith.subf %115, %113 : vector<16x128xf32>
    %cst_22 = arith.constant 0.000000e+00 : f32
    %117 = vector.broadcast %cst_22 : f32 to vector<16x128xf32>
    %118 = arith.select %12, %116, %117 : vector<16x128xi1>, vector<16x128xf32>
    %119 = arith.extui %12 : vector<16x128xi1> to vector<16x128xi32>
    %120 = arith.sitofp %119 : vector<16x128xi32> to vector<16x128xf32>
    %121 = vector.extract_strided_slice %118 {offsets = [0, 0], sizes = [8, 128], strides = [1, 1]} : vector<16x128xf32> to vector<8x128xf32>
    %122 = vector.extract_strided_slice %118 {offsets = [8, 0], sizes = [8, 128], strides = [1, 1]} : vector<16x128xf32> to vector<8x128xf32>
    %123 = arith.addf %121, %122 : vector<8x128xf32>
    %c0_23 = arith.constant 0 : index
    %c0_24 = arith.constant 0 : index
    %c0_25 = arith.constant 0 : index
    %c0_26 = arith.constant 0 : index
    %124 = vector.load %arg6[%c0_23, %c0_24, %c0_25, %c0_26] : memref<1x1x8x128xf32, #tpu.memory_space<vmem>>, vector<1x1x8x128xf32>
    %125 = vector.shape_cast %124 : vector<1x1x8x128xf32> to vector<8x128xf32>
    %126 = vector.shape_cast %123 : vector<8x128xf32> to vector<1x1x8x128xf32>
    tpu.vector_store %arg6[%c0_23, %c0_24, %c0_25, %c0_26], %126 {strides = array<i32>} : memref<1x1x8x128xf32, #tpu.memory_space<vmem>>, vector<1x1x8x128xf32>,
    %127 = vector.extract_strided_slice %120 {offsets = [0, 0], sizes = [8, 128], strides = [1, 1]} : vector<16x128xf32> to vector<8x128xf32>
    %128 = vector.extract_strided_slice %120 {offsets = [8, 0], sizes = [8, 128], strides = [1, 1]} : vector<16x128xf32> to vector<8x128xf32>
    %129 = arith.addf %127, %128 : vector<8x128xf32>
    %c0_27 = arith.constant 0 : index
    %c0_28 = arith.constant 0 : index
    %c0_29 = arith.constant 0 : index
    %c0_30 = arith.constant 0 : index
    %130 = vector.load %arg7[%c0_27, %c0_28, %c0_29, %c0_30] : memref<1x1x8x128xf32, #tpu.memory_space<vmem>>, vector<1x1x8x128xf32>
    %131 = vector.shape_cast %130 : vector<1x1x8x128xf32> to vector<8x128xf32>
    %132 = vector.shape_cast %129 : vector<8x128xf32> to vector<1x1x8x128xf32>
    tpu.vector_store %arg7[%c0_27, %c0_28, %c0_29, %c0_30], %132 {strides = array<i32>} : memref<1x1x8x128xf32, #tpu.memory_space<vmem>>, vector<1x1x8x128xf32>,
    return
  }
  func.func @transform_0(%arg0: i32, %arg1: i32) -> (i32, i32, i32) {
    %c0_i32 = arith.constant 0 : i32
    %c0_i32_0 = arith.constant 0 : i32
    %c0_i32_1 = arith.constant 0 : i32
    return %arg0, %c0_i32, %c0_i32_0 : i32, i32, i32
  }
  func.func @transform_1(%arg0: i32, %arg1: i32) -> (i32, i32) {
    %c0_i32 = arith.constant 0 : i32
    %c0_i32_0 = arith.constant 0 : i32
    return %arg1, %c0_i32 : i32, i32
  }
  func.func @transform_2(%arg0: i32, %arg1: i32) -> (i32, i32) {
    %c0_i32 = arith.constant 0 : i32
    %c0_i32_0 = arith.constant 0 : i32
    %c0_i32_1 = arith.constant 0 : i32
    return %c0_i32, %c0_i32_0 : i32, i32
  }
  func.func @transform_3(%arg0: i32, %arg1: i32) -> (i32, i32, i32) {
    %c0_i32 = arith.constant 0 : i32
    %c0_i32_0 = arith.constant 0 : i32
    return %arg0, %arg1, %c0_i32 : i32, i32, i32
  }
  func.func @transform_4(%arg0: i32, %arg1: i32) -> (i32, i32, i32, i32) {
    %c0_i32 = arith.constant 0 : i32
    %c0_i32_0 = arith.constant 0 : i32
    %c0_i32_1 = arith.constant 0 : i32
    return %arg0, %arg1, %c0_i32, %c0_i32_0 : i32, i32, i32, i32
  }
  func.func @transform_5(%arg0: i32, %arg1: i32) -> (i32, i32, i32, i32) {
    %c0_i32 = arith.constant 0 : i32
    %c0_i32_0 = arith.constant 0 : i32
    %c0_i32_1 = arith.constant 0 : i32
    return %arg0, %arg1, %c0_i32, %c0_i32_0 : i32, i32, i32, i32
  }
}

</mosaic_0001>

<llo_original>
// kernel: linear_loss.1
$region0: #{linear_loss.1}
  #allocation0 [shape = 'u32[]', space=smem, size = 0x4, offset = 0x4, fixed_abs, tag = 'smem constant byte address 0x4 - core index']
  #allocation1 [shape = 'u32[144,128]{1,0:T(1,128)}', space=vmem, size = 0x12000, scoped, tag = 'internal scratch']
  %s0 = inlined_call_operand.vmem [shape: bf16[2,64,8], index: 0, kind: input, shape index: {}]
  %s1 = inlined_call_operand.vmem [shape: bf16[16,8], index: 1, kind: input, shape index: {}]
  %s2 = inlined_call_operand.vmem [shape: bf16[8,128], index: 2, kind: input, shape index: {}]
  %s3 = inlined_call_operand.vmem [shape: s32[2,16,128], index: 3, kind: input, shape index: {}]
  %s4 = inlined_call_operand.vmem [shape: f32[2,1,8,128], index: 4, kind: output, shape index: {0}]
  %s5 = inlined_call_operand.vmem [shape: f32[2,1,8,128], index: 5, kind: output, shape index: {1}]
  %6 = xla_tuple %s4, %s5
  %s7 = sld [smem:[#allocation0]]
  $region57: #{linear_loss.1} parent=0
    _
  %s9 = ssub.s32 1, %s7
  %s10 = scalar_select 0, %s9, %s7
  loop: start=0, step=1, limit=4
  $region2: #{linear_loss.1} parent=0 // loop_pre_header
    _
  $region3: #{linear_loss.1} parent=0 // loop_header
    %s12 = sphi 0, %s16
    %p13 = scmp.ge.s32.totalorder %s12, 4
    %s19 = sphi 0, %s31
    %s20 = sphi 0, %s27
    %s21 = sphi 0, %s19
    %s22 = sphi 0, %s20
    %s23 = sphi 0, %s21
    %s24 = sphi 0, %s22
    %s34 = sphi 0, %s36
    %s37 = sphi 0, %s34
    %s38 = sphi 0, %s37
    %s54 = sphi 0, %s38
    %s60 = sphi 0, %s62
    %s63 = sphi 0, %s60
    %s64 = sphi 0, %s63
    %s80 = sphi 0, %s64
    %s84 = sphi 0, %s84
    %s86 = sphi 0, %s84
    %s87 = sphi 0, %s86
    %s101 = sphi 0, %s87
    %s109 = sphi 0, %s111
    %s112 = sphi 0, %s109
    %s113 = sphi 0, %s112
    %s129 = sphi 0, %s113
    %s137 = sphi 0, %s139
    %s140 = sphi 0, %s137
    %s141 = sphi 0, %s140
    %s157 = sphi 0, %s141
    %s165 = sphi 0, %s167
    %s168 = sphi 0, %s165
    %s169 = sphi 0, %s168
    %s185 = sphi 0, %s169
  $region4: #{linear_loss.1} parent=0 // loop_header_branch
    %15 = sbr.rel (%p13) target = $region8
  $region5: #{linear_loss.1} parent=0 // loop_body
    %s17 = ssub.s32 %s12, 1
    %s18 = ssub.s32 %s12, 2
    %s25 = sadd.s32 1, %s20
    %p26 = scmp.ge.s32.totalorder %s25, 1
    %s27 = scalar_select %p26, 0, %s25
    %s28 = sadd.s32 1, %s19
    %s29 = scalar_select %p26, %s28, %s19
    %p30 = scmp.ge.s32.totalorder %s29, 2
    %s31 = scalar_select %p30, 0, %s29
    %s32 = ssub.s32 %s19, %s31
    %p33 = scmp.eq.s32.totalorder %s32, 0
    %s35 = sadd.s32 %s34, 1
    %s36 = scalar_select %p33, %s34, %s35
    %p39 = pneg %p33
    %p40 = scmp.eq.s32.totalorder %s12, 1
    %p41 = por %p39, %p40
    %p42 = scmp.ne.s32.totalorder %s34, %s37
    %p43 = scmp.eq.s32.totalorder %s12, 0
    %p44 = por %p42, %p43
    %p45 = scmp.ne.s32.totalorder %s34, %s37
    %p46 = scmp.eq.s32.totalorder %s17, 1
    %p47 = por %p45, %p46
    %p48 = scmp.ne.s32.totalorder %s37, %s38
    %p49 = scmp.eq.s32.totalorder %s17, 0
    %p50 = por %p48, %p49
    %p51 = scmp.ne.s32.totalorder %s37, %s38
    %p52 = scmp.eq.s32.totalorder %s18, 1
    %p53 = por %p51, %p52
    %p55 = scmp.ne.s32.totalorder %s38, %s54
    %p56 = scmp.eq.s32.totalorder %s18, 0
    %p57 = por %p55, %p56
    %s58 = ssub.s32 %s20, %s27
    %p59 = scmp.eq.s32.totalorder %s58, 0
    %s61 = sadd.s32 %s60, 1
    %s62 = scalar_select %p59, %s60, %s61
    %p65 = pneg %p59
    %p66 = scmp.eq.s32.totalorder %s12, 1
    %p67 = por %p65, %p66
    %p68 = scmp.ne.s32.totalorder %s60, %s63
    %p69 = scmp.eq.s32.totalorder %s12, 0
    %p70 = por %p68, %p69
    %p71 = scmp.ne.s32.totalorder %s60, %s63
    %p72 = scmp.eq.s32.totalorder %s17, 1
    %p73 = por %p71, %p72
    %p74 = scmp.ne.s32.totalorder %s63, %s64
    %p75 = scmp.eq.s32.totalorder %s17, 0
    %p76 = por %p74, %p75
    %p77 = scmp.ne.s32.totalorder %s63, %s64
    %p78 = scmp.eq.s32.totalorder %s18, 1
    %p79 = por %p77, %p78
    %p81 = scmp.ne.s32.totalorder %s64, %s80
    %p82 = scmp.eq.s32.totalorder %s18, 0
    %p83 = por %p81, %p82
    %s85 = sadd.s32 %s84, 1
    %p88 = scmp.eq.s32.totalorder %s12, 1
    %p89 = scmp.ne.s32.totalorder %s84, %s86
    %p90 = scmp.eq.s32.totalorder %s12, 0
    %p91 = por %p89, %p90
    %p92 = scmp.ne.s32.totalorder %s84, %s86
    %p93 = scmp.eq.s32.totalorder %s17, 1
    %p94 = por %p92, %p93
    %p95 = scmp.ne.s32.totalorder %s86, %s87
    %p96 = scmp.eq.s32.totalorder %s17, 0
    %p97 = por %p95, %p96
    %p98 = scmp.ne.s32.totalorder %s86, %s87
    %p99 = scmp.eq.s32.totalorder %s18, 1
    %p100 = por %p98, %p99
    %p102 = scmp.ne.s32.totalorder %s87, %s101
    %p103 = scmp.eq.s32.totalorder %s18, 0
    %p104 = por %p102, %p103
    %s105 = ssub.s32 %s19, %s31
    %s106 = ssub.s32 %s20, %s27
    %s107 = sor.u32 %s105, %s106
    %p108 = scmp.eq.s32.totalorder %s107, 0
    %s110 = sadd.s32 %s109, 1
    %s111 = scalar_select %p108, %s109, %s110
    %p114 = pneg %p108
    %p115 = scmp.eq.s32.totalorder %s12, 1
    %p116 = por %p114, %p115
    %p117 = scmp.ne.s32.totalorder %s109, %s112
    %p118 = scmp.eq.s32.totalorder %s12, 0
    %p119 = por %p117, %p118
    %p120 = scmp.ne.s32.totalorder %s109, %s112
    %p121 = scmp.eq.s32.totalorder %s17, 1
    %p122 = por %p120, %p121
    %p123 = scmp.ne.s32.totalorder %s112, %s113
    %p124 = scmp.eq.s32.totalorder %s17, 0
    %p125 = por %p123, %p124
    %p126 = scmp.ne.s32.totalorder %s112, %s113
    %p127 = scmp.eq.s32.totalorder %s18, 1
    %p128 = por %p126, %p127
    %p130 = scmp.ne.s32.totalorder %s113, %s129
    %p131 = scmp.eq.s32.totalorder %s18, 0
    %p132 = por %p130, %p131
    %s133 = ssub.s32 %s19, %s31
    %s134 = ssub.s32 %s20, %s27
    %s135 = sor.u32 %s133, %s134
    %p136 = scmp.eq.s32.totalorder %s135, 0
    %s138 = sadd.s32 %s137, 1
    %s139 = scalar_select %p136, %s137, %s138
    %p142 = pneg %p136
    %p143 = scmp.eq.s32.totalorder %s12, 1
    %p144 = por %p142, %p143
    %p145 = scmp.ne.s32.totalorder %s137, %s140
    %p146 = scmp.eq.s32.totalorder %s12, 0
    %p147 = por %p145, %p146
    %p148 = scmp.ne.s32.totalorder %s137, %s140
    %p149 = scmp.eq.s32.totalorder %s17, 1
    %p150 = por %p148, %p149
    %p151 = scmp.ne.s32.totalorder %s140, %s141
    %p152 = scmp.eq.s32.totalorder %s17, 0
    %p153 = por %p151, %p152
    %p154 = scmp.ne.s32.totalorder %s140, %s141
    %p155 = scmp.eq.s32.totalorder %s18, 1
    %p156 = por %p154, %p155
    %p158 = scmp.ne.s32.totalorder %s141, %s157
    %p159 = scmp.eq.s32.totalorder %s18, 0
    %p160 = por %p158, %p159
    %s161 = ssub.s32 %s19, %s31
    %s162 = ssub.s32 %s20, %s27
    %s163 = sor.u32 %s161, %s162
    %p164 = scmp.eq.s32.totalorder %s163, 0
    %s166 = sadd.s32 %s165, 1
    %s167 = scalar_select %p164, %s165, %s166
    %p170 = pneg %p164
    %p171 = scmp.eq.s32.totalorder %s12, 1
    %p172 = por %p170, %p171
    %p173 = scmp.ne.s32.totalorder %s165, %s168
    %p174 = scmp.eq.s32.totalorder %s12, 0
    %p175 = por %p173, %p174
    %p176 = scmp.ne.s32.totalorder %s165, %s168
    %p177 = scmp.eq.s32.totalorder %s17, 1
    %p178 = por %p176, %p177
    %p179 = scmp.ne.s32.totalorder %s168, %s169
    %p180 = scmp.eq.s32.totalorder %s17, 0
    %p181 = por %p179, %p180
    %p182 = scmp.ne.s32.totalorder %s168, %s169
    %p183 = scmp.eq.s32.totalorder %s18, 1
    %p184 = por %p182, %p183
    %p186 = scmp.ne.s32.totalorder %s169, %s185
    %p187 = scmp.eq.s32.totalorder %s18, 0
    %p188 = por %p186, %p187
    %p189 = scmp.le.s32.totalorder 1, %s12
    %p190 = scmp.lt.s32.totalorder %s12, 3
    %p191 = pnand %p189, %p190
    %p192 = pneg %p191
    // Predicated region
    $region9: #{linear_loss.1} parent=5 // pred_check
      _
    $region10: #{linear_loss.1} parent=5 // pred_check_branch
      %194 = sbr.rel (%p191) target = $region12
    $region11: #{linear_loss.1} parent=5 // pred_region
      %s195 = ssub.s32 %s12, 1
      // Predicated region
      $region13: #{linear_loss.1} parent=11 // pred_check
        %p196 = pneg %p76
      $region14: #{linear_loss.1} parent=11 // pred_check_branch
        %198 = sbr.rel (%p196) target = $region16
      $region15: #{linear_loss.1} parent=11 // pred_region
        %s199 = smul.u32 2, %s22
        %p200 = scmp.lt.s32.totalorder %s199, 1
        %s201 = scalar_select %p200, %s199, 1
        %s202 = smul.addr %s201, 4
        %s203 = scalar_lea.vmem %s1, %s202
        %s204 = smul.u32 2, %s22
      $region16: #{linear_loss.1} parent=11 // pred_fallthru
        _
      // Predicated region
      $region17: #{linear_loss.1} parent=11 // pred_check
        %p205 = pneg %p97
      $region18: #{linear_loss.1} parent=11 // pred_check_branch
        %207 = sbr.rel (%p205) target = $region20
      $region19: #{linear_loss.1} parent=11 // pred_region
        _
      $region20: #{linear_loss.1} parent=11 // pred_fallthru
        _
    $region12: #{linear_loss.1} parent=5 // pred_fallthru
      _
    %p208 = scmp.lt.s32.totalorder %s12, 2
    // Predicated region
    $region21: #{linear_loss.1} parent=5 // pred_check
      %p209 = pneg %p208
    $region22: #{linear_loss.1} parent=5 // pred_check_branch
      %211 = sbr.rel (%p209) target = $region24
    $region23: #{linear_loss.1} parent=5 // pred_region
      // Predicated region
      $region25: #{linear_loss.1} parent=23 // pred_check
        %p212 = pneg %p44
      $region26: #{linear_loss.1} parent=23 // pred_check_branch
        %214 = sbr.rel (%p212) target = $region28
      $region27: #{linear_loss.1} parent=23 // pred_region
        %p215 = scmp.lt.s32.totalorder %s19, 1
        %s216 = scalar_select %p215, %s19, 1
        %s217 = smul.addr %s216, 8
        %s218 = smul.addr %s217, 4
        %s219 = scalar_lea.vmem %s0, %s218
      $region28: #{linear_loss.1} parent=23 // pred_fallthru
        _
      // Predicated region
      $region29: #{linear_loss.1} parent=23 // pred_check
        %p220 = pneg %p119
      $region30: #{linear_loss.1} parent=23 // pred_check_branch
        %222 = sbr.rel (%p220) target = $region32
      $region31: #{linear_loss.1} parent=23 // pred_region
        %s223 = smul.u32 2, %s20
        %p224 = scmp.lt.s32.totalorder %s19, 1
        %s225 = scalar_select %p224, %s19, 1
        %p226 = scmp.lt.s32.totalorder %s223, 1
        %s227 = scalar_select %p226, %s223, 1
        %s228 = smul.addr %s225, 2
        %s229 = sadd.s32 %s227, %s228
        %s230 = smul.addr %s229, 8
        %s231 = scalar_lea.vmem %s3, %s230
        %s232 = smul.u32 2, %s20
      $region32: #{linear_loss.1} parent=23 // pred_fallthru
        _
    $region24: #{linear_loss.1} parent=5 // pred_fallthru
      _
    %p233 = scmp.le.s32.totalorder 1, %s12
    %p234 = scmp.lt.s32.totalorder %s12, 3
    %p235 = pnand %p233, %p234
    %p236 = pneg %p235
    // Predicated region
    $region33: #{linear_loss.1} parent=5 // pred_check
      _
    $region34: #{linear_loss.1} parent=5 // pred_check_branch
      %238 = sbr.rel (%p235) target = $region36
    $region35: #{linear_loss.1} parent=5 // pred_region
      %s239 = ssub.s32 %s12, 1
      %p240 = scmp.lt.s32.totalorder %s21, 1
      %s241 = scalar_select %p240, %s21, 1
      %s242 = smul.addr %s241, 8
      %s243 = smul.addr %s242, 4
      %s244 = scalar_lea.vmem %s0, %s243
      %p245 = pneg %p50
      %p246 = pneg %p47
      %s247 = smul.u32 2, %s22
      %p248 = scmp.lt.s32.totalorder %s247, 1
      %s249 = scalar_select %p248, %s247, 1
      %s250 = smul.addr %s249, 4
      %s251 = scalar_lea.vmem %s1, %s250
      %p252 = pneg %p76
      %p253 = pneg %p73
      %p254 = pneg %p97
      %p255 = pneg %p94
      %s256 = smul.u32 2, %s22
      %p257 = scmp.lt.s32.totalorder %s21, 1
      %s258 = scalar_select %p257, %s21, 1
      %p259 = scmp.lt.s32.totalorder %s256, 1
      %s260 = scalar_select %p259, %s256, 1
      %s261 = smul.addr %s258, 2
      %s262 = sadd.s32 %s260, %s261
      %s263 = smul.addr %s262, 8
      %s264 = scalar_lea.vmem %s3, %s263
      %p265 = pneg %p125
      %p266 = pneg %p122
      %p267 = pneg %p153
      %p268 = pneg %p150
      %p269 = scmp.lt.s32.totalorder %s21, 1
      %s270 = scalar_select %p269, %s21, 1
      %p271 = scmp.lt.s32.totalorder %s22, 0
      %s272 = scalar_select %p271, %s22, 0
      %s273 = sadd.s32 %s272, %s270
      %s274 = smul.addr %s273, 8
      %s275 = scalar_lea.vmem %s4, %s274
      %p276 = pneg %p181
      %p277 = pneg %p178
      %p278 = scmp.lt.s32.totalorder %s21, 1
      %s279 = scalar_select %p278, %s21, 1
      %p280 = scmp.lt.s32.totalorder %s22, 0
      %s281 = scalar_select %p280, %s22, 0
      %s282 = sadd.s32 %s281, %s279
      %s283 = smul.addr %s282, 8
      %s284 = scalar_lea.vmem %s5, %s283
      %p285 = scmp.lt.s32.totalorder %s21, 1
      %s286 = scalar_select %p285, %s21, 1
      %s287 = smul.addr %s286, 8
      %s288 = smul.addr %s287, 4
      %s289 = scalar_lea.vmem %s0, %s288
      %s290 = smul.u32 2, %s22
      %p291 = scmp.lt.s32.totalorder %s290, 1
      %s292 = scalar_select %p291, %s290, 1
      %s293 = smul.addr %s292, 4
      %s294 = scalar_lea.vmem %s1, %s293
      %s295 = smul.u32 2, %s22
      %s296 = smul.u32 2, %s22
      %p297 = scmp.lt.s32.totalorder %s21, 1
      %s298 = scalar_select %p297, %s21, 1
      %p299 = scmp.lt.s32.totalorder %s296, 1
      %s300 = scalar_select %p299, %s296, 1
      %s301 = smul.addr %s298, 2
      %s302 = sadd.s32 %s300, %s301
      %s303 = smul.addr %s302, 8
      %s304 = scalar_lea.vmem %s3, %s303
      %s305 = smul.u32 2, %s22
      %p306 = scmp.lt.s32.totalorder %s21, 1
      %s307 = scalar_select %p306, %s21, 1
      %p308 = scmp.lt.s32.totalorder %s22, 0
      %s309 = scalar_select %p308, %s22, 0
      %s310 = sadd.s32 %s309, %s307
      %s311 = smul.addr %s310, 8
      %s312 = scalar_lea.vmem %s4, %s311
      %p313 = scmp.lt.s32.totalorder %s21, 1
      %s314 = scalar_select %p313, %s21, 1
      %p315 = scmp.lt.s32.totalorder %s22, 0
      %s316 = scalar_select %p315, %s22, 0
      %s317 = sadd.s32 %s316, %s314
      %s318 = smul.addr %s317, 8
      %s319 = scalar_lea.vmem %s5, %s318
      %v321 = vld [vmem:[%s289] sm:$0xf]
      %v322 = vld [vmem:[%s289 + $0x4] sm:$0xf]
      %v323 = vld [vmem:[%s289 + $0x8] sm:$0xf]
      %v324 = vld [vmem:[%s289 + $0xc] sm:$0xf]
      %v325 = vld [vmem:[%s289 + $0x10] sm:$0xf]
      %v326 = vld [vmem:[%s289 + $0x14] sm:$0xf]
      %v327 = vld [vmem:[%s289 + $0x18] sm:$0xf]
      %v328 = vld [vmem:[%s289 + $0x1c] sm:$0xf]
      %v329 = vld [vmem:[%s2] sm:$0xf]
      %v330 = vld [vmem:[%s294] sm:$0xf]
      %v331 = vld [vmem:[%s294 + $0x4] sm:$0xf]
      %v340 = vunpack.c.l.b16 %v321
      %v341 = vunpack.c.l.b16 %v322
      %v342 = vunpack.c.l.b16 %v323
      %v343 = vunpack.c.l.b16 %v324
      %v344 = vunpack.c.l.b16 %v325
      %v345 = vunpack.c.l.b16 %v326
      %v346 = vunpack.c.l.b16 %v327
      %v347 = vunpack.c.l.b16 %v328
      %v348 = vpack.c.b16 %v341, %v340
      %v349 = vpack.c.b16 %v343, %v342
      %v350 = vpack.c.b16 %v345, %v344
      %v351 = vpack.c.b16 %v347, %v346
      %vm352 = vcmask 64512
      %v354 = vsel %vm352, %v348, 0
      %v357 = vsel %vm352, %v349, 0
      %v360 = vsel %vm352, %v350, 0
      %v363 = vsel %vm352, %v351, 0
      %vm365 = vcmask 1043456
      %v367 = vsel %vm365, %v329, 0
      %369 = vmatprep.subr.bf16.mxu0 0
      %370 = vmatpush1.bf16.msra.mxu0 %v367
      %371 = vmatprep.subr.bf16.mxu0 0
      %372 = vmatpush1.bf16.msra.mxu0 0
      %373 = vmatprep.subr.bf16.mxu0 0
      %374 = vmatpush1.bf16.msra.mxu0 0
      %375 = vmatprep.subr.bf16.mxu0 0
      %376 = vmatpush1.bf16.msra.mxu0 0
      %377 = vmatprep.subr.bf16.mxu0 0
      %378 = vmatpush1.bf16.msra.mxu0 0
      %379 = vmatprep.subr.bf16.mxu0 0
      %380 = vmatpush1.bf16.msra.mxu0 0
      %381 = vmatprep.subr.bf16.mxu0 0
      %382 = vmatpush1.bf16.msra.mxu0 0
      %383 = vmatprep.subr.bf16.mxu0 0
      %384 = vmatpush1.bf16.msra.mxu0 0
      %385 = vmatprep.subr.bf16.mxu0 0
      %386 = vmatpush1.bf16.msra.mxu0 0
      %387 = vmatprep.subr.bf16.mxu0 0
      %388 = vmatpush1.bf16.msra.mxu0 0
      %389 = vmatprep.subr.bf16.mxu0 0
      %390 = vmatpush1.bf16.msra.mxu0 0
      %391 = vmatprep.subr.bf16.mxu0 0
      %392 = vmatpush1.bf16.msra.mxu0 0
      %393 = vmatprep.subr.bf16.mxu0 0
      %394 = vmatpush1.bf16.msra.mxu0 0
      %395 = vmatprep.subr.bf16.mxu0 0
      %396 = vmatpush1.bf16.msra.mxu0 0
      %397 = vmatprep.subr.bf16.mxu0 0
      %398 = vmatpush1.bf16.msra.mxu0 0
      %399 = vmatprep.subr.bf16.mxu0 0
      %400 = vmatpush1.bf16.msra.mxu0 0
      %401 = vmatprep.mubr.bf16.mxu0 0
      %402 = vmatmul.mubr.bf16.gmra.mrb[0].mxu0 %v354
      %v403 = vpop.f32.mrb[0].mxu0
      %v404 = vadd.f32 0.0, %v403
      %v405 = vpop.f32.mrb[0].mxu0
      %v406 = vpop.f32.mrb[0].mxu0
      %v407 = vadd.f32 0.0, %v406
      %v408 = vpop.f32.mrb[0].mxu0
      %409 = vmatprep.mubr.bf16.mxu0 0
      %410 = vmatmul.mubr.bf16.gmra.mrb[0].mxu0 %v357
      %v411 = vpop.f32.mrb[0].mxu0
      %v412 = vadd.f32 0.0, %v411
      %v413 = vpop.f32.mrb[0].mxu0
      %v414 = vpop.f32.mrb[0].mxu0
      %v415 = vadd.f32 0.0, %v414
      %v416 = vpop.f32.mrb[0].mxu0
      %417 = vmatprep.mubr.bf16.mxu0 0
      %418 = vmatmul.mubr.bf16.gmra.mrb[0].mxu0 %v360
      %v419 = vpop.f32.mrb[0].mxu0
      %v420 = vadd.f32 0.0, %v419
      %v421 = vpop.f32.mrb[0].mxu0
      %v422 = vpop.f32.mrb[0].mxu0
      %v423 = vadd.f32 0.0, %v422
      %v424 = vpop.f32.mrb[0].mxu0
      %425 = vmatprep.mubr.bf16.mxu0 0
      %426 = vmatmul.mubr.bf16.gmra.mrb[0].mxu0 %v363
      %v427 = vpop.f32.mrb[0].mxu0
      %v428 = vadd.f32 0.0, %v427
      %v429 = vpop.f32.mrb[0].mxu0
      %v430 = vpop.f32.mrb[0].mxu0
      %v431 = vadd.f32 0.0, %v430
      %v432 = vpop.f32.mrb[0].mxu0
      %433 = vdwg.mxu0
      %v434 = vpack.c.bf16 %v407, %v404
      %v435 = vpack.c.bf16 %v415, %v412
      %v436 = vpack.c.bf16 %v423, %v420
      %v437 = vpack.c.bf16 %v431, %v428
      %v438 = vld [vmem:[%s304] sm:$0xff]
      %v439 = vld [vmem:[%s304 + $0x8] sm:$0xff]
      %vm440 = vcmp.ge.s32.totalorder %v438, 0
      %vm441 = vcmp.ge.s32.totalorder %v439, 0
      %vm442 = vcmp.lt.s32.totalorder %v438, 8
      %vm443 = vcmp.lt.s32.totalorder %v439, 8
      %vm444 = vmand %vm440, %vm442
      %vm445 = vmand %vm441, %vm443
      %v446 = vsel %vm444, %v438, 0
      %v447 = vsel %vm445, %v439, 0
      %v450 = vunpack.c.l.b16 %v330
      %v451 = vunpack.c.l.b16 %v331
      %v452 = vpack.c.b16 %v451, %v450
      %v454 = vsel %vm352, %v452, 0
      %v457 = vsel %vm365, %v434, 0
      %459 = vmatprep.subr.bf16.mxu0 0
      %460 = vmatpush1.bf16.msra.mxu0 %v457
      %461 = vmatprep.subr.bf16.mxu0 0
      %462 = vmatpush1.bf16.msra.mxu0 0
      %463 = vmatprep.subr.bf16.mxu0 0
      %464 = vmatpush1.bf16.msra.mxu0 0
      %465 = vmatprep.subr.bf16.mxu0 0
      %466 = vmatpush1.bf16.msra.mxu0 0
      %467 = vmatprep.subr.bf16.mxu0 0
      %468 = vmatpush1.bf16.msra.mxu0 0
      %469 = vmatprep.subr.bf16.mxu0 0
      %470 = vmatpush1.bf16.msra.mxu0 0
      %471 = vmatprep.subr.bf16.mxu0 0
      %472 = vmatpush1.bf16.msra.mxu0 0
      %473 = vmatprep.subr.bf16.mxu0 0
      %474 = vmatpush1.bf16.msra.mxu0 0
      %475 = vmatprep.subr.bf16.mxu0 0
      %476 = vmatpush1.bf16.msra.mxu0 0
      %477 = vmatprep.subr.bf16.mxu0 0
      %478 = vmatpush1.bf16.msra.mxu0 0
      %479 = vmatprep.subr.bf16.mxu0 0
      %480 = vmatpush1.bf16.msra.mxu0 0
      %481 = vmatprep.subr.bf16.mxu0 0
      %482 = vmatpush1.bf16.msra.mxu0 0
      %483 = vmatprep.subr.bf16.mxu0 0
      %484 = vmatpush1.bf16.msra.mxu0 0
      %485 = vmatprep.subr.bf16.mxu0 0
      %486 = vmatpush1.bf16.msra.mxu0 0
      %487 = vmatprep.subr.bf16.mxu0 0
      %488 = vmatpush1.bf16.msra.mxu0 0
      %489 = vmatprep.subr.bf16.mxu0 0
      %490 = vmatpush1.bf16.msra.mxu0 0
      %491 = vmatprep.mubr.bf16.mxu0 0
      %492 = vmatmul.mubr.bf16.gmra.mrb[0].mxu0 %v454
      %v493 = vpop.f32.mrb[0].mxu0
      %v494 = vadd.f32 0.0, %v493
      %v495 = vpop.f32.mrb[0].mxu0
      %v496 = vpop.f32.mrb[0].mxu0
      %v497 = vadd.f32 0.0, %v496
      %v498 = vpop.f32.mrb[0].mxu0
      %499 = vdwg.mxu0
      %v500 = vmax.f32 %v494, -1e+30
      %v501 = vmax.f32 %v497, -1e+30
      %v502 = vsub.f32 -1e+30, %v500
      %v503 = vsub.f32 -1e+30, %v501
      %v504 = vmul.f32 %v502, 1.442695
      %v505 = vpow.pop %v504
      %v506 = vmul.f32 %v503, 1.442695
      %v507 = vpow.pop %v506
      %v508 = vmul.f32 %v505, 0.0
      %v509 = vmul.f32 %v507, 0.0
      %v510 = vsub.f32 %v494, %v500
      %v511 = vsub.f32 %v497, %v501
      %v512 = vmul.f32 %v510, 1.442695
      %v513 = vpow.pop %v512
      %v514 = vmul.f32 %v511, 1.442695
      %v515 = vpow.pop %v514
      %v516 = vadd.f32 %v508, %v513
      %v517 = vadd.f32 %v509, %v515
      %vm518 = vcmp.eq.s32.totalorder %v446, 0
      %vm519 = vcmp.eq.s32.totalorder %v447, 0
      %v520 = vsel %vm518, %v494, 0.0
      %v521 = vsel %vm519, %v497, 0.0
      %v523 = vrot.slane %v434, 4
      %v525 = vsel %vm365, %v523, 0
      %527 = vmatprep.subr.bf16.mxu0 0
      %528 = vmatpush1.bf16.msra.mxu0 %v525
      %529 = vmatprep.subr.bf16.mxu0 0
      %530 = vmatpush1.bf16.msra.mxu0 0
      %531 = vmatprep.subr.bf16.mxu0 0
      %532 = vmatpush1.bf16.msra.mxu0 0
      %533 = vmatprep.subr.bf16.mxu0 0
      %534 = vmatpush1.bf16.msra.mxu0 0
      %535 = vmatprep.subr.bf16.mxu0 0
      %536 = vmatpush1.bf16.msra.mxu0 0
      %537 = vmatprep.subr.bf16.mxu0 0
      %538 = vmatpush1.bf16.msra.mxu0 0
      %539 = vmatprep.subr.bf16.mxu0 0
      %540 = vmatpush1.bf16.msra.mxu0 0
      %541 = vmatprep.subr.bf16.mxu0 0
      %542 = vmatpush1.bf16.msra.mxu0 0
      %543 = vmatprep.subr.bf16.mxu0 0
      %544 = vmatpush1.bf16.msra.mxu0 0
      %545 = vmatprep.subr.bf16.mxu0 0
      %546 = vmatpush1.bf16.msra.mxu0 0
      %547 = vmatprep.subr.bf16.mxu0 0
      %548 = vmatpush1.bf16.msra.mxu0 0
      %549 = vmatprep.subr.bf16.mxu0 0
      %550 = vmatpush1.bf16.msra.mxu0 0
      %551 = vmatprep.subr.bf16.mxu0 0
      %552 = vmatpush1.bf16.msra.mxu0 0
      %553 = vmatprep.subr.bf16.mxu0 0
      %554 = vmatpush1.bf16.msra.mxu0 0
      %555 = vmatprep.subr.bf16.mxu0 0
      %556 = vmatpush1.bf16.msra.mxu0 0
      %557 = vmatprep.subr.bf16.mxu0 0
      %558 = vmatpush1.bf16.msra.mxu0 0
      %559 = vmatprep.mubr.bf16.mxu0 0
      %560 = vmatmul.mubr.bf16.gmra.mrb[0].mxu0 %v454
      %v561 = vpop.f32.mrb[0].mxu0
      %v562 = vadd.f32 0.0, %v561
      %v563 = vpop.f32.mrb[0].mxu0
      %v564 = vpop.f32.mrb[0].mxu0
      %v565 = vadd.f32 0.0, %v564
      %v566 = vpop.f32.mrb[0].mxu0
      %567 = vdwg.mxu0
      %v568 = vmax.f32 %v500, %v562
      %v569 = vmax.f32 %v501, %v565
      %v570 = vsub.f32 %v500, %v568
      %v571 = vsub.f32 %v501, %v569
      %v572 = vmul.f32 %v570, 1.442695
      %v573 = vpow.pop %v572
      %v574 = vmul.f32 %v571, 1.442695
      %v575 = vpow.pop %v574
      %v576 = vmul.f32 %v516, %v573
      %v577 = vmul.f32 %v517, %v575
      %v578 = vsub.f32 %v562, %v568
      %v579 = vsub.f32 %v565, %v569
      %v580 = vmul.f32 %v578, 1.442695
      %v581 = vpow.pop %v580
      %v582 = vmul.f32 %v579, 1.442695
      %v583 = vpow.pop %v582
      %v584 = vadd.f32 %v576, %v581
      %v585 = vadd.f32 %v577, %v583
      %vm586 = vcmp.eq.s32.totalorder %v446, 1
      %vm587 = vcmp.eq.s32.totalorder %v447, 1
      %v588 = vsel %vm586, %v562, %v520
      %v589 = vsel %vm587, %v565, %v521
      %v591 = vsel %vm365, %v435, 0
      %593 = vmatprep.subr.bf16.mxu0 0
      %594 = vmatpush1.bf16.msra.mxu0 %v591
      %595 = vmatprep.subr.bf16.mxu0 0
      %596 = vmatpush1.bf16.msra.mxu0 0
      %597 = vmatprep.subr.bf16.mxu0 0
      %598 = vmatpush1.bf16.msra.mxu0 0
      %599 = vmatprep.subr.bf16.mxu0 0
      %600 = vmatpush1.bf16.msra.mxu0 0
      %601 = vmatprep.subr.bf16.mxu0 0
      %602 = vmatpush1.bf16.msra.mxu0 0
      %603 = vmatprep.subr.bf16.mxu0 0
      %604 = vmatpush1.bf16.msra.mxu0 0
      %605 = vmatprep.subr.bf16.mxu0 0
      %606 = vmatpush1.bf16.msra.mxu0 0
      %607 = vmatprep.subr.bf16.mxu0 0
      %608 = vmatpush1.bf16.msra.mxu0 0
      %609 = vmatprep.subr.bf16.mxu0 0
      %610 = vmatpush1.bf16.msra.mxu0 0
      %611 = vmatprep.subr.bf16.mxu0 0
      %612 = vmatpush1.bf16.msra.mxu0 0
      %613 = vmatprep.subr.bf16.mxu0 0
      %614 = vmatpush1.bf16.msra.mxu0 0
      %615 = vmatprep.subr.bf16.mxu0 0
      %616 = vmatpush1.bf16.msra.mxu0 0
      %617 = vmatprep.subr.bf16.mxu0 0
      %618 = vmatpush1.bf16.msra.mxu0 0
      %619 = vmatprep.subr.bf16.mxu0 0
      %620 = vmatpush1.bf16.msra.mxu0 0
      %621 = vmatprep.subr.bf16.mxu0 0
      %622 = vmatpush1.bf16.msra.mxu0 0
      %623 = vmatprep.subr.bf16.mxu0 0
      %624 = vmatpush1.bf16.msra.mxu0 0
      %625 = vmatprep.mubr.bf16.mxu0 0
      %626 = vmatmul.mubr.bf16.gmra.mrb[0].mxu0 %v454
      %v627 = vpop.f32.mrb[0].mxu0
      %v628 = vadd.f32 0.0, %v627
      %v629 = vpop.f32.mrb[0].mxu0
      %v630 = vpop.f32.mrb[0].mxu0
      %v631 = vadd.f32 0.0, %v630
      %v632 = vpop.f32.mrb[0].mxu0
      %633 = vdwg.mxu0
      %v634 = vmax.f32 %v568, %v628
      %v635 = vmax.f32 %v569, %v631
      %v636 = vsub.f32 %v568, %v634
      %v637 = vsub.f32 %v569, %v635
      %v638 = vmul.f32 %v636, 1.442695
      %v639 = vpow.pop %v638
      %v640 = vmul.f32 %v637, 1.442695
      %v641 = vpow.pop %v640
      %v642 = vmul.f32 %v584, %v639
      %v643 = vmul.f32 %v585, %v641
      %v644 = vsub.f32 %v628, %v634
      %v645 = vsub.f32 %v631, %v635
      %v646 = vmul.f32 %v644, 1.442695
      %v647 = vpow.pop %v646
      %v648 = vmul.f32 %v645, 1.442695
      %v649 = vpow.pop %v648
      %v650 = vadd.f32 %v642, %v647
      %v651 = vadd.f32 %v643, %v649
      %vm652 = vcmp.eq.s32.totalorder %v446, 2
      %vm653 = vcmp.eq.s32.totalorder %v447, 2
      %v654 = vsel %vm652, %v628, %v588
      %v655 = vsel %vm653, %v631, %v589
      %v657 = vrot.slane %v435, 4
      %v659 = vsel %vm365, %v657, 0
      %661 = vmatprep.subr.bf16.mxu0 0
      %662 = vmatpush1.bf16.msra.mxu0 %v659
      %663 = vmatprep.subr.bf16.mxu0 0
      %664 = vmatpush1.bf16.msra.mxu0 0
      %665 = vmatprep.subr.bf16.mxu0 0
      %666 = vmatpush1.bf16.msra.mxu0 0
      %667 = vmatprep.subr.bf16.mxu0 0
      %668 = vmatpush1.bf16.msra.mxu0 0
      %669 = vmatprep.subr.bf16.mxu0 0
      %670 = vmatpush1.bf16.msra.mxu0 0
      %671 = vmatprep.subr.bf16.mxu0 0
      %672 = vmatpush1.bf16.msra.mxu0 0
      %673 = vmatprep.subr.bf16.mxu0 0
      %674 = vmatpush1.bf16.msra.mxu0 0
      %675 = vmatprep.subr.bf16.mxu0 0
      %676 = vmatpush1.bf16.msra.mxu0 0
      %677 = vmatprep.subr.bf16.mxu0 0
      %678 = vmatpush1.bf16.msra.mxu0 0
      %679 = vmatprep.subr.bf16.mxu0 0
      %680 = vmatpush1.bf16.msra.mxu0 0
      %681 = vmatprep.subr.bf16.mxu0 0
      %682 = vmatpush1.bf16.msra.mxu0 0
      %683 = vmatprep.subr.bf16.mxu0 0
      %684 = vmatpush1.bf16.msra.mxu0 0
      %685 = vmatprep.subr.bf16.mxu0 0
      %686 = vmatpush1.bf16.msra.mxu0 0
      %687 = vmatprep.subr.bf16.mxu0 0
      %688 = vmatpush1.bf16.msra.mxu0 0
      %689 = vmatprep.subr.bf16.mxu0 0
      %690 = vmatpush1.bf16.msra.mxu0 0
      %691 = vmatprep.subr.bf16.mxu0 0
      %692 = vmatpush1.bf16.msra.mxu0 0
      %693 = vmatprep.mubr.bf16.mxu0 0
      %694 = vmatmul.mubr.bf16.gmra.mrb[0].mxu0 %v454
      %v695 = vpop.f32.mrb[0].mxu0
      %v696 = vadd.f32 0.0, %v695
      %v697 = vpop.f32.mrb[0].mxu0
      %v698 = vpop.f32.mrb[0].mxu0
      %v699 = vadd.f32 0.0, %v698
      %v700 = vpop.f32.mrb[0].mxu0
      %701 = vdwg.mxu0
      %v702 = vmax.f32 %v634, %v696
      %v703 = vmax.f32 %v635, %v699
      %v704 = vsub.f32 %v634, %v702
      %v705 = vsub.f32 %v635, %v703
      %v706 = vmul.f32 %v704, 1.442695
      %v707 = vpow.pop %v706
      %v708 = vmul.f32 %v705, 1.442695
      %v709 = vpow.pop %v708
      %v710 = vmul.f32 %v650, %v707
      %v711 = vmul.f32 %v651, %v709
      %v712 = vsub.f32 %v696, %v702
      %v713 = vsub.f32 %v699, %v703
      %v714 = vmul.f32 %v712, 1.442695
      %v715 = vpow.pop %v714
      %v716 = vmul.f32 %v713, 1.442695
      %v717 = vpow.pop %v716
      %v718 = vadd.f32 %v710, %v715
      %v719 = vadd.f32 %v711, %v717
      %vm720 = vcmp.eq.s32.totalorder %v446, 3
      %vm721 = vcmp.eq.s32.totalorder %v447, 3
      %v722 = vsel %vm720, %v696, %v654
      %v723 = vsel %vm721, %v699, %v655
      %v725 = vsel %vm365, %v436, 0
      %727 = vmatprep.subr.bf16.mxu0 0
      %728 = vmatpush1.bf16.msra.mxu0 %v725
      %729 = vmatprep.subr.bf16.mxu0 0
      %730 = vmatpush1.bf16.msra.mxu0 0
      %731 = vmatprep.subr.bf16.mxu0 0
      %732 = vmatpush1.bf16.msra.mxu0 0
      %733 = vmatprep.subr.bf16.mxu0 0
      %734 = vmatpush1.bf16.msra.mxu0 0
      %735 = vmatprep.subr.bf16.mxu0 0
      %736 = vmatpush1.bf16.msra.mxu0 0
      %737 = vmatprep.subr.bf16.mxu0 0
      %738 = vmatpush1.bf16.msra.mxu0 0
      %739 = vmatprep.subr.bf16.mxu0 0
      %740 = vmatpush1.bf16.msra.mxu0 0
      %741 = vmatprep.subr.bf16.mxu0 0
      %742 = vmatpush1.bf16.msra.mxu0 0
      %743 = vmatprep.subr.bf16.mxu0 0
      %744 = vmatpush1.bf16.msra.mxu0 0
      %745 = vmatprep.subr.bf16.mxu0 0
      %746 = vmatpush1.bf16.msra.mxu0 0
      %747 = vmatprep.subr.bf16.mxu0 0
      %748 = vmatpush1.bf16.msra.mxu0 0
      %749 = vmatprep.subr.bf16.mxu0 0
      %750 = vmatpush1.bf16.msra.mxu0 0
      %751 = vmatprep.subr.bf16.mxu0 0
      %752 = vmatpush1.bf16.msra.mxu0 0
      %753 = vmatprep.subr.bf16.mxu0 0
      %754 = vmatpush1.bf16.msra.mxu0 0
      %755 = vmatprep.subr.bf16.mxu0 0
      %756 = vmatpush1.bf16.msra.mxu0 0
      %757 = vmatprep.subr.bf16.mxu0 0
      %758 = vmatpush1.bf16.msra.mxu0 0
      %759 = vmatprep.mubr.bf16.mxu0 0
      %760 = vmatmul.mubr.bf16.gmra.mrb[0].mxu0 %v454
      %v761 = vpop.f32.mrb[0].mxu0
      %v762 = vadd.f32 0.0, %v761
      %v763 = vpop.f32.mrb[0].mxu0
      %v764 = vpop.f32.mrb[0].mxu0
      %v765 = vadd.f32 0.0, %v764
      %v766 = vpop.f32.mrb[0].mxu0
      %767 = vdwg.mxu0
      %v768 = vmax.f32 %v702, %v762
      %v769 = vmax.f32 %v703, %v765
      %v770 = vsub.f32 %v702, %v768
      %v771 = vsub.f32 %v703, %v769
      %v772 = vmul.f32 %v770, 1.442695
      %v773 = vpow.pop %v772
      %v774 = vmul.f32 %v771, 1.442695
      %v775 = vpow.pop %v774
      %v776 = vmul.f32 %v718, %v773
      %v777 = vmul.f32 %v719, %v775
      %v778 = vsub.f32 %v762, %v768
      %v779 = vsub.f32 %v765, %v769
      %v780 = vmul.f32 %v778, 1.442695
      %v781 = vpow.pop %v780
      %v782 = vmul.f32 %v779, 1.442695
      %v783 = vpow.pop %v782
      %v784 = vadd.f32 %v776, %v781
      %v785 = vadd.f32 %v777, %v783
      %vm786 = vcmp.eq.s32.totalorder %v446, 4
      %vm787 = vcmp.eq.s32.totalorder %v447, 4
      %v788 = vsel %vm786, %v762, %v722
      %v789 = vsel %vm787, %v765, %v723
      %v791 = vrot.slane %v436, 4
      %v793 = vsel %vm365, %v791, 0
      %795 = vmatprep.subr.bf16.mxu0 0
      %796 = vmatpush1.bf16.msra.mxu0 %v793
      %797 = vmatprep.subr.bf16.mxu0 0
      %798 = vmatpush1.bf16.msra.mxu0 0
      %799 = vmatprep.subr.bf16.mxu0 0
      %800 = vmatpush1.bf16.msra.mxu0 0
      %801 = vmatprep.subr.bf16.mxu0 0
      %802 = vmatpush1.bf16.msra.mxu0 0
      %803 = vmatprep.subr.bf16.mxu0 0
      %804 = vmatpush1.bf16.msra.mxu0 0
      %805 = vmatprep.subr.bf16.mxu0 0
      %806 = vmatpush1.bf16.msra.mxu0 0
      %807 = vmatprep.subr.bf16.mxu0 0
      %808 = vmatpush1.bf16.msra.mxu0 0
      %809 = vmatprep.subr.bf16.mxu0 0
      %810 = vmatpush1.bf16.msra.mxu0 0
      %811 = vmatprep.subr.bf16.mxu0 0
      %812 = vmatpush1.bf16.msra.mxu0 0
      %813 = vmatprep.subr.bf16.mxu0 0
      %814 = vmatpush1.bf16.msra.mxu0 0
      %815 = vmatprep.subr.bf16.mxu0 0
      %816 = vmatpush1.bf16.msra.mxu0 0
      %817 = vmatprep.subr.bf16.mxu0 0
      %818 = vmatpush1.bf16.msra.mxu0 0
      %819 = vmatprep.subr.bf16.mxu0 0
      %820 = vmatpush1.bf16.msra.mxu0 0
      %821 = vmatprep.subr.bf16.mxu0 0
      %822 = vmatpush1.bf16.msra.mxu0 0
      %823 = vmatprep.subr.bf16.mxu0 0
      %824 = vmatpush1.bf16.msra.mxu0 0
      %825 = vmatprep.subr.bf16.mxu0 0
      %826 = vmatpush1.bf16.msra.mxu0 0
      %827 = vmatprep.mubr.bf16.mxu0 0
      %828 = vmatmul.mubr.bf16.gmra.mrb[0].mxu0 %v454
      %v829 = vpop.f32.mrb[0].mxu0
      %v830 = vadd.f32 0.0, %v829
      %v831 = vpop.f32.mrb[0].mxu0
      %v832 = vpop.f32.mrb[0].mxu0
      %v833 = vadd.f32 0.0, %v832
      %v834 = vpop.f32.mrb[0].mxu0
      %835 = vdwg.mxu0
      %v836 = vmax.f32 %v768, %v830
      %v837 = vmax.f32 %v769, %v833
      %v838 = vsub.f32 %v768, %v836
      %v839 = vsub.f32 %v769, %v837
      %v840 = vmul.f32 %v838, 1.442695
      %v841 = vpow.pop %v840
      %v842 = vmul.f32 %v839, 1.442695
      %v843 = vpow.pop %v842
      %v844 = vmul.f32 %v784, %v841
      %v845 = vmul.f32 %v785, %v843
      %v846 = vsub.f32 %v830, %v836
      %v847 = vsub.f32 %v833, %v837
      %v848 = vmul.f32 %v846, 1.442695
      %v849 = vpow.pop %v848
      %v850 = vmul.f32 %v847, 1.442695
      %v851 = vpow.pop %v850
      %v852 = vadd.f32 %v844, %v849
      %v853 = vadd.f32 %v845, %v851
      %vm854 = vcmp.eq.s32.totalorder %v446, 5
      %vm855 = vcmp.eq.s32.totalorder %v447, 5
      %v856 = vsel %vm854, %v830, %v788
      %v857 = vsel %vm855, %v833, %v789
      %v859 = vsel %vm365, %v437, 0
      %861 = vmatprep.subr.bf16.mxu0 0
      %862 = vmatpush1.bf16.msra.mxu0 %v859
      %863 = vmatprep.subr.bf16.mxu0 0
      %864 = vmatpush1.bf16.msra.mxu0 0
      %865 = vmatprep.subr.bf16.mxu0 0
      %866 = vmatpush1.bf16.msra.mxu0 0
      %867 = vmatprep.subr.bf16.mxu0 0
      %868 = vmatpush1.bf16.msra.mxu0 0
      %869 = vmatprep.subr.bf16.mxu0 0
      %870 = vmatpush1.bf16.msra.mxu0 0
      %871 = vmatprep.subr.bf16.mxu0 0
      %872 = vmatpush1.bf16.msra.mxu0 0
      %873 = vmatprep.subr.bf16.mxu0 0
      %874 = vmatpush1.bf16.msra.mxu0 0
      %875 = vmatprep.subr.bf16.mxu0 0
      %876 = vmatpush1.bf16.msra.mxu0 0
      %877 = vmatprep.subr.bf16.mxu0 0
      %878 = vmatpush1.bf16.msra.mxu0 0
      %879 = vmatprep.subr.bf16.mxu0 0
      %880 = vmatpush1.bf16.msra.mxu0 0
      %881 = vmatprep.subr.bf16.mxu0 0
      %882 = vmatpush1.bf16.msra.mxu0 0
      %883 = vmatprep.subr.bf16.mxu0 0
      %884 = vmatpush1.bf16.msra.mxu0 0
      %885 = vmatprep.subr.bf16.mxu0 0
      %886 = vmatpush1.bf16.msra.mxu0 0
      %887 = vmatprep.subr.bf16.mxu0 0
      %888 = vmatpush1.bf16.msra.mxu0 0
      %889 = vmatprep.subr.bf16.mxu0 0
      %890 = vmatpush1.bf16.msra.mxu0 0
      %891 = vmatprep.subr.bf16.mxu0 0
      %892 = vmatpush1.bf16.msra.mxu0 0
      %893 = vmatprep.mubr.bf16.mxu0 0
      %894 = vmatmul.mubr.bf16.gmra.mrb[0].mxu0 %v454
      %v895 = vpop.f32.mrb[0].mxu0
      %v896 = vadd.f32 0.0, %v895
      %v897 = vpop.f32.mrb[0].mxu0
      %v898 = vpop.f32.mrb[0].mxu0
      %v899 = vadd.f32 0.0, %v898
      %v900 = vpop.f32.mrb[0].mxu0
      %901 = vdwg.mxu0
      %v902 = vmax.f32 %v836, %v896
      %v903 = vmax.f32 %v837, %v899
      %v904 = vsub.f32 %v836, %v902
      %v905 = vsub.f32 %v837, %v903
      %v906 = vmul.f32 %v904, 1.442695
      %v907 = vpow.pop %v906
      %v908 = vmul.f32 %v905, 1.442695
      %v909 = vpow.pop %v908
      %v910 = vmul.f32 %v852, %v907
      %v911 = vmul.f32 %v853, %v909
      %v912 = vsub.f32 %v896, %v902
      %v913 = vsub.f32 %v899, %v903
      %v914 = vmul.f32 %v912, 1.442695
      %v915 = vpow.pop %v914
      %v916 = vmul.f32 %v913, 1.442695
      %v917 = vpow.pop %v916
      %v918 = vadd.f32 %v910, %v915
      %v919 = vadd.f32 %v911, %v917
      %vm920 = vcmp.eq.s32.totalorder %v446, 6
      %vm921 = vcmp.eq.s32.totalorder %v447, 6
      %v922 = vsel %vm920, %v896, %v856
      %v923 = vsel %vm921, %v899, %v857
      %v925 = vrot.slane %v437, 4
      %v927 = vsel %vm365, %v925, 0
      %929 = vmatprep.subr.bf16.mxu0 0
      %930 = vmatpush1.bf16.msra.mxu0 %v927
      %931 = vmatprep.subr.bf16.mxu0 0
      %932 = vmatpush1.bf16.msra.mxu0 0
      %933 = vmatprep.subr.bf16.mxu0 0
      %934 = vmatpush1.bf16.msra.mxu0 0
      %935 = vmatprep.subr.bf16.mxu0 0
      %936 = vmatpush1.bf16.msra.mxu0 0
      %937 = vmatprep.subr.bf16.mxu0 0
      %938 = vmatpush1.bf16.msra.mxu0 0
      %939 = vmatprep.subr.bf16.mxu0 0
      %940 = vmatpush1.bf16.msra.mxu0 0
      %941 = vmatprep.subr.bf16.mxu0 0
      %942 = vmatpush1.bf16.msra.mxu0 0
      %943 = vmatprep.subr.bf16.mxu0 0
      %944 = vmatpush1.bf16.msra.mxu0 0
      %945 = vmatprep.subr.bf16.mxu0 0
      %946 = vmatpush1.bf16.msra.mxu0 0
      %947 = vmatprep.subr.bf16.mxu0 0
      %948 = vmatpush1.bf16.msra.mxu0 0
      %949 = vmatprep.subr.bf16.mxu0 0
      %950 = vmatpush1.bf16.msra.mxu0 0
      %951 = vmatprep.subr.bf16.mxu0 0
      %952 = vmatpush1.bf16.msra.mxu0 0
      %953 = vmatprep.subr.bf16.mxu0 0
      %954 = vmatpush1.bf16.msra.mxu0 0
      %955 = vmatprep.subr.bf16.mxu0 0
      %956 = vmatpush1.bf16.msra.mxu0 0
      %957 = vmatprep.subr.bf16.mxu0 0
      %958 = vmatpush1.bf16.msra.mxu0 0
      %959 = vmatprep.subr.bf16.mxu0 0
      %960 = vmatpush1.bf16.msra.mxu0 0
      %961 = vmatprep.mubr.bf16.mxu0 0
      %962 = vmatmul.mubr.bf16.gmra.mrb[0].mxu0 %v454
      %v963 = vpop.f32.mrb[0].mxu0
      %v964 = vadd.f32 0.0, %v963
      %v965 = vpop.f32.mrb[0].mxu0
      %v966 = vpop.f32.mrb[0].mxu0
      %v967 = vadd.f32 0.0, %v966
      %v968 = vpop.f32.mrb[0].mxu0
      %969 = vdwg.mxu0
      %v970 = vmax.f32 %v902, %v964
      %v971 = vmax.f32 %v903, %v967
      %v972 = vsub.f32 %v902, %v970
      %v973 = vsub.f32 %v903, %v971
      %v974 = vmul.f32 %v972, 1.442695
      %v975 = vpow.pop %v974
      %v976 = vmul.f32 %v973, 1.442695
      %v977 = vpow.pop %v976
      %v978 = vmul.f32 %v918, %v975
      %v979 = vmul.f32 %v919, %v977
      %v980 = vsub.f32 %v964, %v970
      %v981 = vsub.f32 %v967, %v971
      %v982 = vmul.f32 %v980, 1.442695
      %v983 = vpow.pop %v982
      %v984 = vmul.f32 %v981, 1.442695
      %v985 = vpow.pop %v984
      %v986 = vadd.f32 %v978, %v983
      %v987 = vadd.f32 %v979, %v985
      %vm988 = vcmp.eq.s32.totalorder %v446, 7
      %vm989 = vcmp.eq.s32.totalorder %v447, 7
      %v990 = vsel %vm988, %v964, %v922
      %v991 = vsel %vm989, %v967, %v923
      %v992 = vlog2.pop %v986
      %v993 = vmul.f32 %v992, 0.6931472
      %v994 = vlog2.pop %v987
      %v995 = vmul.f32 %v994, 0.6931472
      %v996 = vadd.f32 %v993, %v970
      %v997 = vadd.f32 %v995, %v971
      %v998 = vsub.f32 %v996, %v990
      %v999 = vsub.f32 %v997, %v991
      %v1000 = vsel %vm444, %v998, 0.0
      %v1001 = vsel %vm445, %v999, 0.0
      %v1002 = vsel %vm444, 1, 0
      %v1003 = vsel %vm445, 1, 0
      %v1004 = vcvt.s32.f32 %v1002
      %v1005 = vcvt.s32.f32 %v1003
      %v1006 = vadd.f32 %v1000, %v1001
      %1007 = vst [vmem:[%s312] sm:$0xff] %v1006
      %v1008 = vadd.f32 %v1004, %v1005
      %1009 = vst [vmem:[%s319] sm:$0xff] %v1008
      %p1010 = scmp.lt.s32.totalorder %s21, 1
      %s1011 = scalar_select %p1010, %s21, 1
      %p1012 = scmp.lt.s32.totalorder %s22, 0
      %s1013 = scalar_select %p1012, %s22, 0
      %s1014 = sadd.s32 %s1013, %s1011
      %s1015 = smul.addr %s1014, 8
      %s1016 = scalar_lea.vmem %s4, %s1015
      %p1017 = scmp.lt.s32.totalorder %s21, 1
      %s1018 = scalar_select %p1017, %s21, 1
      %p1019 = scmp.lt.s32.totalorder %s22, 0
      %s1020 = scalar_select %p1019, %s22, 0
      %s1021 = sadd.s32 %s1020, %s1018
      %s1022 = smul.addr %s1021, 8
      %s1023 = scalar_lea.vmem %s5, %s1022
      // Predicated region
      $region37: #{linear_loss.1} parent=35 // pred_check
        %p1024 = pneg %p150
      $region38: #{linear_loss.1} parent=35 // pred_check_branch
        %1026 = sbr.rel (%p1024) target = $region40
      $region39: #{linear_loss.1} parent=35 // pred_region
        _
      $region40: #{linear_loss.1} parent=35 // pred_fallthru
        _
      // Predicated region
      $region41: #{linear_loss.1} parent=35 // pred_check
        %p1027 = pneg %p178
      $region42: #{linear_loss.1} parent=35 // pred_check_branch
        %1029 = sbr.rel (%p1027) target = $region44
      $region43: #{linear_loss.1} parent=35 // pred_region
        _
      $region44: #{linear_loss.1} parent=35 // pred_fallthru
        _
    $region36: #{linear_loss.1} parent=5 // pred_fallthru
      _
    %p1030 = scmp.le.s32.totalorder 2, %s12
    // Predicated region
    $region45: #{linear_loss.1} parent=5 // pred_check
      %p1031 = pneg %p1030
    $region46: #{linear_loss.1} parent=5 // pred_check_branch
      %1033 = sbr.rel (%p1031) target = $region48
    $region47: #{linear_loss.1} parent=5 // pred_region
      %s1034 = ssub.s32 %s12, 2
      // Predicated region
      $region49: #{linear_loss.1} parent=47 // pred_check
        %p1035 = pneg %p156
      $region50: #{linear_loss.1} parent=47 // pred_check_branch
        %1037 = sbr.rel (%p1035) target = $region52
      $region51: #{linear_loss.1} parent=47 // pred_region
        %p1038 = scmp.lt.s32.totalorder %s23, 1
        %s1039 = scalar_select %p1038, %s23, 1
        %p1040 = scmp.lt.s32.totalorder %s24, 0
        %s1041 = scalar_select %p1040, %s24, 0
        %s1042 = sadd.s32 %s1041, %s1039
        %s1043 = smul.addr %s1042, 8
        %s1044 = scalar_lea.vmem %s4, %s1043
      $region52: #{linear_loss.1} parent=47 // pred_fallthru
        _
      // Predicated region
      $region53: #{linear_loss.1} parent=47 // pred_check
        %p1045 = pneg %p184
      $region54: #{linear_loss.1} parent=47 // pred_check_branch
        %1047 = sbr.rel (%p1045) target = $region56
      $region55: #{linear_loss.1} parent=47 // pred_region
        %p1048 = scmp.lt.s32.totalorder %s23, 1
        %s1049 = scalar_select %p1048, %s23, 1
        %p1050 = scmp.lt.s32.totalorder %s24, 0
        %s1051 = scalar_select %p1050, %s24, 0
        %s1052 = sadd.s32 %s1051, %s1049
        %s1053 = smul.addr %s1052, 8
        %s1054 = scalar_lea.vmem %s5, %s1053
      $region56: #{linear_loss.1} parent=47 // pred_fallthru
        _
    $region48: #{linear_loss.1} parent=5 // pred_fallthru
      _
  $region6: #{linear_loss.1} parent=0 // loop_footer
    %s16 = sadd.s32 1, %s12
  $region7: #{linear_loss.1} parent=0 // loop_footer_branch
    %11 = sbr.rel target = $region3
  $region8: #{linear_loss.1} parent=0 // loop_exit
    _

</llo_original>
